<compile_context>
chip_gen: v7x
topology: tpu7x:2x2x1
jax: 0.10.0
libtpu: 0.0.40
codegen_flags: <defaults>
</compile_context>

<pallas_src>
import math
from functools import partial

import jax
import jax.numpy as jnp
from jax import lax
from jax.experimental import pallas as pl
from jax.experimental.pallas import tpu as pltpu


# --------------------------------------------------------------------------
# Generation-aware constants
# --------------------------------------------------------------------------
def _chip_kind():
    try:
        return jax.devices()[0].device_kind.lower()
    except Exception:  # pragma: no cover - defensive
        return ""


_KIND = _chip_kind()
_NEW_GEN = any(t in _KIND for t in ("v6", "v7", "7x"))   # v6e / v7x

LANE = 1024                 # lane-dense last dim (multiple of 128)
MIN_TILE_ROWS = 16          # bf16 sublane packing needs rows % 16 == 0
TILE_ROWS = 1024 if _NEW_GEN else 512
# 1024-row f32 blocks: ~2*(4+4+2..4) MiB double-buffered working set -> give
# Mosaic an explicit scoped-VMEM budget on v6e/v7x.  512-row blocks fit the
# 16 MiB v5e scoped default, so no flag there.
VMEM_LIMIT = (28 << 20) if _NEW_GEN else None
MXU_TILE = 256 if _NEW_GEN else 128     # 2x256^2 MXU (v6e/v7x) vs 4x128^2 (v5e)


def _round_up(x, m):
    return -(-x // m) * m


def _packed_layout(n_elems):
    """Rows of the packed (rows_p, LANE) buffer and the grid tile height.

    Targets ~4 tiles (and always >= 2) so the 'parallel' grid axis can be
    split across both TensorCores on v7x, while capping the block at
    TILE_ROWS so the double-buffered working set fits the scoped-VMEM budget.
    """
    rows = -(-n_elems // LANE)
    tile_rows = min(TILE_ROWS,
                    max(MIN_TILE_ROWS, _round_up(-(-rows // 4), MIN_TILE_ROWS)))
    rows_p = max(_round_up(rows, tile_rows), 2 * tile_rows)
    return rows_p, tile_rows


def _pack(tensors, rows_p, dtype):
    """Flatten + pad + reshape a list of tensors into the (rows_p, LANE) slab."""
    flat = jnp.concatenate([jnp.ravel(t).astype(dtype) for t in tensors])
    return jnp.pad(flat, (0, rows_p * LANE - flat.shape[0])).reshape(rows_p, LANE)


# --------------------------------------------------------------------------
# Kernel 1: fused EMA update   ema <- d * ema + (1 - d) * param
#   ema is the persistent f32 master slab; param is streamed in its native
#   dtype (e.g. bf16) and upcast on the VPU (hidden under the DMA); d is an
#   SMEM scalar so decay schedules never recompile.
# --------------------------------------------------------------------------
def _ema_update_kernel(ema_ref, param_ref, decay_ref, out_ref):
    d = decay_ref[0]                                   # f32 scalar from SMEM
    p = param_ref[...].astype(jnp.float32)             # in-kernel upcast
    out_ref[...] = d * ema_ref[...] + (1.0 - d) * p


@partial(jax.jit, static_argnums=(3, 4), donate_argnums=(0,))
def _ema_update_packed(ema_packed, model_packed, decay, tile_rows, vmem_limit):
    rows_p, lane = ema_packed.shape
    cp = dict(dimension_semantics=("parallel",))
    if vmem_limit is not None:
        cp["vmem_limit_bytes"] = int(vmem_limit)
    return pl.pallas_call(
        _ema_update_kernel,
        out_shape=jax.ShapeDtypeStruct(ema_packed.shape, ema_packed.dtype),
        grid_spec=pltpu.PrefetchScalarGridSpec(
            num_scalar_prefetch=0,
            grid=(rows_p // tile_rows,),
            in_specs=[
                pl.BlockSpec((tile_rows, lane), lambda i: (i, 0)),   # ema (f32)
                pl.BlockSpec((tile_rows, lane), lambda i: (i, 0)),   # param (native dtype)
                pl.BlockSpec(memory_space=pltpu.MemorySpace.SMEM),   # decay (1,) f32
            ],
            out_specs=pl.BlockSpec((tile_rows, lane), lambda i: (i, 0)),
        ),
        compiler_params=pltpu.CompilerParams(**cp),
        # EMA master is aliased to the output AND donated by the jit wrapper,
        # so the update is genuinely in-place in HBM (PyTorch copy_()).
        input_output_aliases={0: 0},
    )(ema_packed, model_packed, decay)


# --------------------------------------------------------------------------
# Kernel 2: tiled Linear forward  y = x @ W.T + b  (MXU-scale shapes only).
# W arrives in PyTorch layout [Dout, Din]; the contraction on dim 1 of both
# operands is expressed directly to dot_general, so no transpose pass exists
# anywhere (neither wrapper nor kernel).
# --------------------------------------------------------------------------
def _linear_tile_kernel(x_ref, w_ref, b_ref, o_ref, acc_ref):
    @pl.when(pl.program_id(2) == 0)
    def _init():
        acc_ref[...] = jnp.zeros_like(acc_ref)

    acc_ref[...] += lax.dot_general(
        x_ref[...], w_ref[...],
        dimension_numbers=(((1,), (1,)), ((), ())),
        preferred_element_type=jnp.float32)

    @pl.when(pl.program_id(2) == pl.num_programs(2) - 1)
    def _finalize():
        o_ref[...] = (acc_ref[...] + b_ref[...]).astype(o_ref.dtype)


def _pallas_linear(x, w, b):
    B, Din = x.shape
    Dout = w.shape[0]
    tm = 128
    tn = tk = MXU_TILE
    Bp, Doutp, Dinp = _round_up(B, tm), _round_up(Dout, tn), _round_up(Din, tk)
    # TODO(synk): for a real persistent inner model, pad the weight/bias once
    # at init instead of per call.
    xp = jnp.pad(x, ((0, Bp - B), (0, Dinp - Din)))
    wp = jnp.pad(w, ((0, Doutp - Dout), (0, Dinp - Din)))
    bp = jnp.pad(b.reshape(1, -1), ((0, 0), (0, Doutp - Dout)))

    out = pl.pallas_call(
        _linear_tile_kernel,
        out_shape=jax.ShapeDtypeStruct((Bp, Doutp), x.dtype),
        grid_spec=pltpu.PrefetchScalarGridSpec(
            num_scalar_prefetch=0,
            grid=(Bp // tm, Doutp // tn, Dinp // tk),
            in_specs=[
                pl.BlockSpec((tm, tk), lambda i, j, k: (i, k)),     # x
                pl.BlockSpec((tn, tk), lambda i, j, k: (j, k)),     # w (PyTorch layout)
                pl.BlockSpec((1, tn), lambda i, j, k: (0, j)),      # bias
            ],
            out_specs=pl.BlockSpec((tm, tn), lambda i, j, k: (i, j)),
            scratch_shapes=[pltpu.VMEM((tm, tn), jnp.float32)],
        ),
        compiler_params=pltpu.CompilerParams(
            dimension_semantics=("parallel", "parallel", "arbitrary")),
    )(xp, wp, bp)
    return out[:B, :Dout]


def linear_forward(x, w, b):
    """y = x @ w.T + b (PyTorch Linear semantics).

    Tiny shapes: plain XLA (pallas dispatch + (8,128) padding would dominate
    and XLA fuses the GEMM with neighbours for free).  MXU-scale shapes: the
    tiled Pallas matmul above.
    """
    B, Din = x.shape
    Dout = w.shape[0]
    if B < 128 or Din < 128 or Dout < 128:
        return x @ w.T + b
    return _pallas_linear(x, w, b)


# --------------------------------------------------------------------------
# EMAModel — JAX analogue of assignment_2/ema.py
# --------------------------------------------------------------------------
class EMAModel:
    """Keeps an exponential moving average of a list of params/buffers.

    The EMA master is kept permanently in the packed, lane-dense
    (rows, 1024) f32 layout (a 0.002-weighted update would vanish in bf16);
    it is unpacked only on export / forward.
    """

    def __init__(self, params, decay_rate=0.998):
        self._decay_rate = float(decay_rate)
        self._shapes = [tuple(p.shape) for p in params]
        self._sizes = [int(math.prod(s)) if s else 1 for s in self._shapes]
        self._n = sum(self._sizes)
        self._rows_p, self._tile_rows = _packed_layout(self._n)
        # deepcopy analogue: pack ONCE; this slab is the persistent EMA state.
        self._ema_packed = _pack(params, self._rows_p, jnp.float32)

    @property
    def packed(self):
        return self._ema_packed

    def pack_params(self, params, dtype=None):
        """Pack the live model's params in their NATIVE dtype (the kernel
        upcasts).  Call once and reuse across steps — do NOT repack per step."""
        dtype = dtype if dtype is not None else params[0].dtype
        return _pack(params, self._rows_p, dtype)

    def update_packed(self, model_packed, decay=None):
        d = jnp.full((1,), self._decay_rate if decay is None else decay,
                     jnp.float32)
        self._ema_packed = _ema_update_packed(
            self._ema_packed, model_packed, d, self._tile_rows, VMEM_LIMIT)

    def update(self, model_params, decay=None):
        # Convenience path (packs every call); prefer pack_params()+update_packed().
        self.update_packed(self.pack_params(model_params), decay)

    def materialize(self, dtype=jnp.float32):
        """Unpack the EMA master back into per-tensor arrays (export only)."""
        flat = self._ema_packed.reshape(-1)[: self._n]
        out, off = [], 0
        for shp, sz in zip(self._shapes, self._sizes):
            out.append(flat[off:off + sz].reshape(shp).astype(dtype))
            off += sz
        return out

    def __call__(self, x):
        # TODO(synk): the original EMAModel wraps an arbitrary nn.Module; only
        # a synthetic Linear inner model (params = [weight, bias]) is
        # materialized here for forward().
        w, b = self.materialize(jnp.float32)
        return linear_forward(x, w, b)


# --------------------------------------------------------------------------
# Driver
# --------------------------------------------------------------------------
if __name__ == "__main__":
    key = jax.random.PRNGKey(0)
    k_x, k_w, k_b, k_we, k_be = jax.random.split(key, 5)

    batch, hidden = 8, 32

    # Model params at EMA-construction time (stored in bf16, as a training
    # model might keep them).
    w0 = (jax.random.normal(k_w, (hidden, hidden), jnp.float32) * 0.05
          ).astype(jnp.bfloat16)
    b0 = (jax.random.normal(k_b, (hidden,), jnp.float32) * 0.05
          ).astype(jnp.bfloat16)

    # EMAModel.__init__ (deepcopy analogue): pack once into the f32 master.
    ema = EMAModel([w0, b0], decay_rate=0.998)

    # "Trained" live model params (perturbed so the update does real work).
    w_live = w0 + (0.01 * jax.random.normal(k_we, (hidden, hidden), jnp.float32)
                   ).astype(jnp.bfloat16)
    b_live = b0 + (0.01 * jax.random.normal(k_be, (hidden,), jnp.float32)
                   ).astype(jnp.bfloat16)

    # The trainer maintains the packed view of the live params alongside the
    # params themselves: pack ONCE, reuse across steps (native bf16 stream).
    model_packed = ema.pack_params([w_live, b_live])

    # ---- EMAModel.update(model): 3 steps with a warmup decay schedule ------
    decays = [0.95, 0.99, 0.998]          # schedule -> no recompile (SMEM scalar)
    for d in decays:
        ema.update_packed(model_packed, decay=d)
    jax.block_until_ready(ema.packed)

    # pure-JAX reference
    we = w0.astype(jnp.float32)
    be = b0.astype(jnp.float32)
    wl = w_live.astype(jnp.float32)
    bl = b_live.astype(jnp.float32)
    one = jnp.float32(1.0)
    for d in decays:
        d32 = jnp.float32(d)
        we = d32 * we + (one - d32) * wl
        be = d32 * be + (one - d32) * bl

    w_out, b_out = ema.materialize(jnp.float32)
    assert jnp.allclose(w_out, we, atol=1e-6), "EMA weight update mismatch"
    assert jnp.allclose(b_out, be, atol=1e-6), "EMA bias update mismatch"

    # ---- EMAModel.forward(x): delegates to the inner (Linear) model --------
    x = jax.random.normal(k_x, (batch, hidden), jnp.float32)
    y = ema(x)                       # 8x32x32 -> plain-XLA path (per review)
    jax.block_until_ready(y)
    y_ref = x @ we.T + be
    assert y.shape == (batch, hidden)
    assert jnp.allclose(y, y_ref, atol=1e-4), "EMA forward mismatch"

    # ---- MXU-scale forward path: tiled Pallas matmul (no transpose pass) ---
    kb1, kb2, kb3 = jax.random.split(jax.random.PRNGKey(1), 3)
    Wb = jax.random.normal(kb1, (256, 256), jnp.float32) * 0.05
    Bb = jax.random.normal(kb2, (256,), jnp.float32) * 0.05
    Xb = jax.random.normal(kb3, (128, 256), jnp.float32)
    Yb = linear_forward(Xb, Wb, Bb)
    jax.block_until_ready(Yb)
    Yb_ref = Xb @ Wb.T + Bb
    assert jnp.allclose(Yb, Yb_ref, atol=2e-2, rtol=2e-2), \
        "Pallas tiled Linear mismatch"

    print("KERNEL_OK")
</pallas_src>

<mosaic_0001>
module attributes {stable_mosaic.version = 11 : i64} {
  func.func @_ema_update_kernel(%arg0: i32, %arg1: memref<16x1024xf32, #tpu.memory_space<vmem>>, %arg2: memref<16x1024xbf16, #tpu.memory_space<vmem>>, %arg3: memref<1xf32, #tpu.memory_space<smem>>, %arg4: memref<16x1024xf32, #tpu.memory_space<vmem>>) attributes {dimension_semantics = [#tpu.dimension_semantics<parallel>], iteration_bounds = array<i64: 2>, scalar_prefetch = 0 : i64, scratch_operands = 0 : i64, tpu.core_type = #tpu.core_type<tc>, window_params = [{transform_indices = @transform_0, window_bounds = array<i64: 16, 1024>}, {transform_indices = @transform_1, window_bounds = array<i64: 16, 1024>}, {transform_indices = @transform_2, window_bounds = array<i64: 1>}, {transform_indices = @transform_3, window_bounds = array<i64: 16, 1024>}]} {
    %c0 = arith.constant 0 : index
    %0 = memref.load %arg3[%c0] : memref<1xf32, #tpu.memory_space<smem>>
    %c0_0 = arith.constant 0 : index
    %c0_1 = arith.constant 0 : index
    %1 = vector.load %arg2[%c0_0, %c0_1] : memref<16x1024xbf16, #tpu.memory_space<vmem>>, vector<16x1024xbf16>
    %2 = arith.extf %1 : vector<16x1024xbf16> to vector<16x1024xf32>
    %c0_2 = arith.constant 0 : index
    %c0_3 = arith.constant 0 : index
    %3 = vector.load %arg1[%c0_2, %c0_3] : memref<16x1024xf32, #tpu.memory_space<vmem>>, vector<16x1024xf32>
    %4 = vector.broadcast %0 : f32 to vector<16x1024xf32>
    %5 = arith.mulf %4, %3 : vector<16x1024xf32>
    %cst = arith.constant 1.000000e+00 : f32
    %6 = arith.subf %cst, %0 : f32
    %7 = vector.broadcast %6 : f32 to vector<16x1024xf32>
    %8 = arith.mulf %7, %2 : vector<16x1024xf32>
    %9 = arith.addf %5, %8 : vector<16x1024xf32>
    %c0_4 = arith.constant 0 : index
    %c0_5 = arith.constant 0 : index
    %10 = vector.load %arg4[%c0_4, %c0_5] : memref<16x1024xf32, #tpu.memory_space<vmem>>, vector<16x1024xf32>
    tpu.vector_store %arg4[%c0_4, %c0_5], %9 {strides = array<i32>} : memref<16x1024xf32, #tpu.memory_space<vmem>>, vector<16x1024xf32>,
    return
  }
  func.func @transform_0(%arg0: i32) -> (i32, i32) {
    %c0_i32 = arith.constant 0 : i32
    %c0_i32_0 = arith.constant 0 : i32
    return %arg0, %c0_i32 : i32, i32
  }
  func.func @transform_1(%arg0: i32) -> (i32, i32) {
    %c0_i32 = arith.constant 0 : i32
    %c0_i32_0 = arith.constant 0 : i32
    return %arg0, %c0_i32 : i32, i32
  }
  func.func @transform_2(%arg0: i32) -> i32 {
    %c0_i32 = arith.constant 0 : i32
    %c0_i32_0 = arith.constant 0 : i32
    return %c0_i32 : i32
  }
  func.func @transform_3(%arg0: i32) -> (i32, i32) {
    %c0_i32 = arith.constant 0 : i32
    %c0_i32_0 = arith.constant 0 : i32
    return %arg0, %c0_i32 : i32, i32
  }
}

</mosaic_0001>

<llo_original>
// kernel: _ema_update_packed.1
$region0: #{_ema_update_packed.1}
  #allocation0 [shape = 'u32[]', space=smem, size = 0x4, offset = 0x4, fixed_abs, tag = 'smem constant byte address 0x4 - core index']
  #allocation1 [shape = 'u32[144,128]{1,0:T(1,128)}', space=vmem, size = 0x12000, scoped, tag = 'internal scratch']
  #allocation2 [shape = 'f32[1]{0:T(128)S(6)}', space=smem, size = 0x200, scoped, tag = 'scoped memory for _ema_update_packed.1']
  %s0 = inlined_call_operand.hbm [shape: f32[32,1024], index: 0, kind: input, shape index: {}, may-alias: {0,3}]
  %s1 = inlined_call_operand.hbm [shape: bf16[32,1024], index: 1, kind: input, shape index: {}]
  %s2 = inlined_call_operand.<no memory space> [shape: f32[1], index: 2, kind: input, shape index: {}]
  %s3 = inlined_call_operand.hbm [shape: f32[32,1024], index: 3, kind: output, shape index: {}, may-alias: {0,3}]
  %s4 = sld [smem:[#allocation0]]
  $region53: #{_ema_update_packed.1} parent=0
    _
  %s6 = ssub.s32 1, %s4
  %s7 = scalar_select 0, %s6, %s4
  %8 = sst [smem:[#allocation2]] %s2
  $region1: #{_ema_update_packed.1} parent=0
    #allocation3 [shape = 'u8[131072]{0}', space=vmem, size = 0x20000, scoped, tag = 'input window, operand 0']
    #allocation4 [shape = 's32[2]{0}', space=sflag, size = 0x8, scoped, tag = 'scoped memory for _ema_update_packed.1']
    #allocation5 [shape = 's32[2]{0}', space=sflag, size = 0x8, scoped, tag = 'scoped memory for _ema_update_packed.1']
    #allocation6 [shape = 'u8[65536]{0}', space=vmem, size = 0x10000, scoped, tag = 'input window, operand 1']
    #allocation7 [shape = 's32[2]{0}', space=sflag, size = 0x8, scoped, tag = 'scoped memory for _ema_update_packed.1']
    #allocation8 [shape = 'u8[131072]{0}', space=vmem, size = 0x20000, scoped, tag = 'output window, operand 0']
    %9 = vsyncpa [#allocation4], 0
    %s10 = scalar_lea.sflag [#allocation4], 1
    %11 = vsyncpa %s10, 0
    %12 = vsyncpa [#allocation7], 0
    %s13 = scalar_lea.sflag [#allocation7], 1
    %14 = vsyncpa %s13, 0
    %15 = vsyncpa [#allocation5], 0
    %s16 = scalar_lea.sflag [#allocation5], 1
    %17 = vsyncpa %s16, 0
    loop: start=0, step=1, limit=4
    $region2: #{_ema_update_packed.1} parent=1 // loop_pre_header
      _
    $region3: #{_ema_update_packed.1} parent=1 // loop_header
      %s19 = sphi 0, %s23
      %p20 = scmp.ge.s32.totalorder %s19, 4
      %s29 = sphi 0, %s31
      %s32 = sphi 0, %s29
      %s33 = sphi 0, %s32
      %s49 = sphi 0, %s33
      %s55 = sphi 0, %s57
      %s58 = sphi 0, %s55
      %s59 = sphi 0, %s58
      %s75 = sphi 0, %s59
      %s79 = sphi 0, %s79
      %s81 = sphi 0, %s79
      %s82 = sphi 0, %s81
      %s96 = sphi 0, %s82
      %s102 = sphi 0, %s104
      %s105 = sphi 0, %s102
      %s106 = sphi 0, %s105
      %s122 = sphi 0, %s106
    $region4: #{_ema_update_packed.1} parent=1 // loop_header_branch
      %22 = sbr.rel (%p20) target = $region8
    $region5: #{_ema_update_packed.1} parent=1 // loop_body
      %s24 = ssub.s32 %s19, 1
      %s25 = ssub.s32 %s19, 2
      %s26 = sadd.s32 %s19, 1
      %s27 = ssub.s32 %s19, %s26
      %p28 = scmp.eq.s32.totalorder %s27, 0
      %s30 = sadd.s32 %s29, 1
      %s31 = scalar_select %p28, %s29, %s30
      %p34 = pneg %p28
      %p35 = scmp.eq.s32.totalorder %s19, 1
      %p36 = por %p34, %p35
      %p37 = scmp.ne.s32.totalorder %s29, %s32
      %p38 = scmp.eq.s32.totalorder %s19, 0
      %p39 = por %p37, %p38
      %p40 = scmp.ne.s32.totalorder %s29, %s32
      %p41 = scmp.eq.s32.totalorder %s24, 1
      %p42 = por %p40, %p41
      %p43 = scmp.ne.s32.totalorder %s32, %s33
      %p44 = scmp.eq.s32.totalorder %s24, 0
      %p45 = por %p43, %p44
      %p46 = scmp.ne.s32.totalorder %s32, %s33
      %p47 = scmp.eq.s32.totalorder %s25, 1
      %p48 = por %p46, %p47
      %p50 = scmp.ne.s32.totalorder %s33, %s49
      %p51 = scmp.eq.s32.totalorder %s25, 0
      %p52 = por %p50, %p51
      %s53 = ssub.s32 %s19, %s26
      %p54 = scmp.eq.s32.totalorder %s53, 0
      %s56 = sadd.s32 %s55, 1
      %s57 = scalar_select %p54, %s55, %s56
      %p60 = pneg %p54
      %p61 = scmp.eq.s32.totalorder %s19, 1
      %p62 = por %p60, %p61
      %p63 = scmp.ne.s32.totalorder %s55, %s58
      %p64 = scmp.eq.s32.totalorder %s19, 0
      %p65 = por %p63, %p64
      %p66 = scmp.ne.s32.totalorder %s55, %s58
      %p67 = scmp.eq.s32.totalorder %s24, 1
      %p68 = por %p66, %p67
      %p69 = scmp.ne.s32.totalorder %s58, %s59
      %p70 = scmp.eq.s32.totalorder %s24, 0
      %p71 = por %p69, %p70
      %p72 = scmp.ne.s32.totalorder %s58, %s59
      %p73 = scmp.eq.s32.totalorder %s25, 1
      %p74 = por %p72, %p73
      %p76 = scmp.ne.s32.totalorder %s59, %s75
      %p77 = scmp.eq.s32.totalorder %s25, 0
      %p78 = por %p76, %p77
      %s80 = sadd.s32 %s79, 1
      %p83 = scmp.eq.s32.totalorder %s19, 1
      %p84 = scmp.ne.s32.totalorder %s79, %s81
      %p85 = scmp.eq.s32.totalorder %s19, 0
      %p86 = por %p84, %p85
      %p87 = scmp.ne.s32.totalorder %s79, %s81
      %p88 = scmp.eq.s32.totalorder %s24, 1
      %p89 = por %p87, %p88
      %p90 = scmp.ne.s32.totalorder %s81, %s82
      %p91 = scmp.eq.s32.totalorder %s24, 0
      %p92 = por %p90, %p91
      %p93 = scmp.ne.s32.totalorder %s81, %s82
      %p94 = scmp.eq.s32.totalorder %s25, 1
      %p95 = por %p93, %p94
      %p97 = scmp.ne.s32.totalorder %s82, %s96
      %p98 = scmp.eq.s32.totalorder %s25, 0
      %p99 = por %p97, %p98
      %s100 = ssub.s32 %s19, %s26
      %p101 = scmp.eq.s32.totalorder %s100, 0
      %s103 = sadd.s32 %s102, 1
      %s104 = scalar_select %p101, %s102, %s103
      %p107 = pneg %p101
      %p108 = scmp.eq.s32.totalorder %s19, 1
      %p109 = por %p107, %p108
      %p110 = scmp.ne.s32.totalorder %s102, %s105
      %p111 = scmp.eq.s32.totalorder %s19, 0
      %p112 = por %p110, %p111
      %p113 = scmp.ne.s32.totalorder %s102, %s105
      %p114 = scmp.eq.s32.totalorder %s24, 1
      %p115 = por %p113, %p114
      %p116 = scmp.ne.s32.totalorder %s105, %s106
      %p117 = scmp.eq.s32.totalorder %s24, 0
      %p118 = por %p116, %p117
      %p119 = scmp.ne.s32.totalorder %s105, %s106
      %p120 = scmp.eq.s32.totalorder %s25, 1
      %p121 = por %p119, %p120
      %p123 = scmp.ne.s32.totalorder %s106, %s122
      %p124 = scmp.eq.s32.totalorder %s25, 0
      %p125 = por %p123, %p124
      %p126 = scmp.le.s32.totalorder 1, %s19
      %p127 = scmp.lt.s32.totalorder %s19, 3
      %p128 = pnand %p126, %p127
      %p129 = pneg %p128
      // Predicated region
      $region9: #{_ema_update_packed.1} parent=5 // pred_check
        _
      $region10: #{_ema_update_packed.1} parent=5 // pred_check_branch
        %131 = sbr.rel (%p128) target = $region12
      $region11: #{_ema_update_packed.1} parent=5 // pred_region
        %s132 = ssub.s32 %s19, 1
        // Predicated region
        $region13: #{_ema_update_packed.1} parent=11 // pred_check
          %p133 = pneg %p92
        $region14: #{_ema_update_packed.1} parent=11 // pred_check_branch
          %135 = sbr.rel (%p133) target = $region16
        $region15: #{_ema_update_packed.1} parent=11 // pred_region
          _
        $region16: #{_ema_update_packed.1} parent=11 // pred_fallthru
          _
      $region12: #{_ema_update_packed.1} parent=5 // pred_fallthru
        _
      %p136 = scmp.lt.s32.totalorder %s19, 2
      // Predicated region
      $region17: #{_ema_update_packed.1} parent=5 // pred_check
        %p137 = pneg %p136
      $region18: #{_ema_update_packed.1} parent=5 // pred_check_branch
        %139 = sbr.rel (%p137) target = $region20
      $region19: #{_ema_update_packed.1} parent=5 // pred_region
        // Predicated region
        $region21: #{_ema_update_packed.1} parent=19 // pred_check
          %p140 = pneg %p39
        $region22: #{_ema_update_packed.1} parent=19 // pred_check_branch
          %142 = sbr.rel (%p140) target = $region24
        $region23: #{_ema_update_packed.1} parent=19 // pred_region
          %s143 = sand.u32 %s29, 1
          %s144 = scalar_lea.sflag [#allocation4], %s143
          %s145 = sand.u32 %s29, 1
          %s146 = smul.addr %s145, 128
          %s147 = scalar_lea.vmem [#allocation3], %s146
          %s148 = smul.u32 2, %s19
          %s150 = ssub.s32 2048, 2048
          %151 = vsyncadd %s144, %s150
          %s152 = smul.addr %s148, 8
          %s153 = smul.addr %s152, 128
          %s154 = scalar_lea.hbm %s0, %s153
          %s155 = sshll.u32 %s147, 4
          %s156 = int_to_ptr.vmem [resolvable:$true] %s155
          %161 = dma.hbm_to_vmem [thread:$0]  %s154, 2048, %s156, %s144, 1024, 1024, 64
        $region24: #{_ema_update_packed.1} parent=19 // pred_fallthru
          _
        // Predicated region
        $region25: #{_ema_update_packed.1} parent=19 // pred_check
          %p162 = pneg %p65
        $region26: #{_ema_update_packed.1} parent=19 // pred_check_branch
          %164 = sbr.rel (%p162) target = $region28
        $region27: #{_ema_update_packed.1} parent=19 // pred_region
          %s165 = sand.u32 %s55, 1
          %s166 = scalar_lea.sflag [#allocation7], %s165
          %s167 = sand.u32 %s55, 1
          %s168 = smul.addr %s167, 64
          %s169 = scalar_lea.vmem [#allocation6], %s168
          %s170 = smul.u32 2, %s19
          %s172 = ssub.s32 1024, 1024
          %173 = vsyncadd %s166, %s172
          %s174 = smul.addr %s170, 8
          %s175 = smul.addr %s174, 64
          %s176 = scalar_lea.hbm %s1, %s175
          %s177 = sshll.u32 %s169, 4
          %s178 = int_to_ptr.vmem [resolvable:$true] %s177
          %183 = dma.hbm_to_vmem [thread:$0]  %s176, 1024, %s178, %s166, 512, 512, 32
        $region28: #{_ema_update_packed.1} parent=19 // pred_fallthru
          _
      $region20: #{_ema_update_packed.1} parent=5 // pred_fallthru
        _
      %p184 = scmp.le.s32.totalorder 1, %s19
      %p185 = scmp.lt.s32.totalorder %s19, 3
      %p186 = pnand %p184, %p185
      %p187 = pneg %p186
      // Predicated region
      $region29: #{_ema_update_packed.1} parent=5 // pred_check
        _
      $region30: #{_ema_update_packed.1} parent=5 // pred_check_branch
        %189 = sbr.rel (%p186) target = $region32
      $region31: #{_ema_update_packed.1} parent=5 // pred_region
        %s190 = ssub.s32 %s19, 1
        %s191 = sand.u32 %s32, 1
        %s192 = scalar_lea.sflag [#allocation4], %s191
        %s193 = sand.u32 %s32, 1
        %s194 = smul.addr %s193, 128
        %s195 = scalar_lea.vmem [#allocation3], %s194
        // Predicated region
        $region33: #{_ema_update_packed.1} parent=31 // pred_check
          %p196 = pneg %p45
        $region34: #{_ema_update_packed.1} parent=31 // pred_check_branch
          %198 = sbr.rel (%p196) target = $region36
        $region35: #{_ema_update_packed.1} parent=31 // pred_region
          %199 = dma.done %s192, 2048
        $region36: #{_ema_update_packed.1} parent=31 // pred_fallthru
          _
        %s200 = sand.u32 %s58, 1
        %s201 = scalar_lea.sflag [#allocation7], %s200
        %s202 = sand.u32 %s58, 1
        %s203 = smul.addr %s202, 64
        %s204 = scalar_lea.vmem [#allocation6], %s203
        // Predicated region
        $region37: #{_ema_update_packed.1} parent=31 // pred_check
          %p205 = pneg %p71
        $region38: #{_ema_update_packed.1} parent=31 // pred_check_branch
          %207 = sbr.rel (%p205) target = $region40
        $region39: #{_ema_update_packed.1} parent=31 // pred_region
          %208 = dma.done %s201, 1024
        $region40: #{_ema_update_packed.1} parent=31 // pred_fallthru
          _
        %s209 = sand.u32 %s32, 1
        %s210 = scalar_lea.sflag [#allocation4], %s209
        %s211 = sand.u32 %s32, 1
        %s212 = smul.addr %s211, 128
        %s213 = scalar_lea.vmem [#allocation3], %s212
        %p214 = pneg %p45
        %p215 = pneg %p42
        %s216 = sand.u32 %s58, 1
        %s217 = scalar_lea.sflag [#allocation7], %s216
        %s218 = sand.u32 %s58, 1
        %s219 = smul.addr %s218, 64
        %s220 = scalar_lea.vmem [#allocation6], %s219
        %p221 = pneg %p71
        %p222 = pneg %p68
        %p223 = pneg %p92
        %p224 = pneg %p89
        %p225 = pneg %p118
        %p226 = pneg %p115
        %s227 = sand.u32 %s105, 1
        %s228 = scalar_lea.sflag [#allocation5], %s227
        %s229 = sand.u32 %s105, 1
        %s230 = smul.addr %s229, 128
        %s231 = scalar_lea.vmem [#allocation8], %s230
        %s232 = smul.u32 2, %s24
        %s233 = smul.u32 2, %s24
        %s234 = smul.u32 2, %s24
        %s235 = sld [smem:[#allocation2]]
        %v236 = vld [vmem:[%s204] sm:$0xff]
        %v237 = vld [vmem:[%s204 + $0x8] sm:$0xff]
        %v238 = vld [vmem:[%s204 + $0x10] sm:$0xff]
        %v239 = vld [vmem:[%s204 + $0x18] sm:$0xff]
        %v240 = vld [vmem:[%s204 + $0x20] sm:$0xff]
        %v241 = vld [vmem:[%s204 + $0x28] sm:$0xff]
        %v242 = vld [vmem:[%s204 + $0x30] sm:$0xff]
        %v243 = vld [vmem:[%s204 + $0x38] sm:$0xff]
        %v244 = vunpack.c.l.bf16 %v236
        %v245 = vunpack.c.h.bf16 %v236
        %v246 = vunpack.c.l.bf16 %v237
        %v247 = vunpack.c.h.bf16 %v237
        %v248 = vunpack.c.l.bf16 %v238
        %v249 = vunpack.c.h.bf16 %v238
        %v250 = vunpack.c.l.bf16 %v239
        %v251 = vunpack.c.h.bf16 %v239
        %v252 = vunpack.c.l.bf16 %v240
        %v253 = vunpack.c.h.bf16 %v240
        %v254 = vunpack.c.l.bf16 %v241
        %v255 = vunpack.c.h.bf16 %v241
        %v256 = vunpack.c.l.bf16 %v242
        %v257 = vunpack.c.h.bf16 %v242
        %v258 = vunpack.c.l.bf16 %v243
        %v259 = vunpack.c.h.bf16 %v243
        %v260 = vld [vmem:[%s195] sm:$0xff]
        %v261 = vld [vmem:[%s195 + $0x8] sm:$0xff]
        %v262 = vld [vmem:[%s195 + $0x10] sm:$0xff]
        %v263 = vld [vmem:[%s195 + $0x18] sm:$0xff]
        %v264 = vld [vmem:[%s195 + $0x20] sm:$0xff]
        %v265 = vld [vmem:[%s195 + $0x28] sm:$0xff]
        %v266 = vld [vmem:[%s195 + $0x30] sm:$0xff]
        %v267 = vld [vmem:[%s195 + $0x38] sm:$0xff]
        %v268 = vld [vmem:[%s195 + $0x40] sm:$0xff]
        %v269 = vld [vmem:[%s195 + $0x48] sm:$0xff]
        %v270 = vld [vmem:[%s195 + $0x50] sm:$0xff]
        %v271 = vld [vmem:[%s195 + $0x58] sm:$0xff]
        %v272 = vld [vmem:[%s195 + $0x60] sm:$0xff]
        %v273 = vld [vmem:[%s195 + $0x68] sm:$0xff]
        %v274 = vld [vmem:[%s195 + $0x70] sm:$0xff]
        %v275 = vld [vmem:[%s195 + $0x78] sm:$0xff]
        %v276 = vstv %s235
        %v277 = vmul.f32 %v276, %v260
        %v278 = vmul.f32 %v276, %v261
        %v279 = vmul.f32 %v276, %v262
        %v280 = vmul.f32 %v276, %v263
        %v281 = vmul.f32 %v276, %v264
        %v282 = vmul.f32 %v276, %v265
        %v283 = vmul.f32 %v276, %v266
        %v284 = vmul.f32 %v276, %v267
        %v285 = vmul.f32 %v276, %v268
        %v286 = vmul.f32 %v276, %v269
        %v287 = vmul.f32 %v276, %v270
        %v288 = vmul.f32 %v276, %v271
        %v289 = vmul.f32 %v276, %v272
        %v290 = vmul.f32 %v276, %v273
        %v291 = vmul.f32 %v276, %v274
        %v292 = vmul.f32 %v276, %v275
        %s293 = ssub.f32 1.0, %s235
        %v294 = vstv %s293
        %v295 = vmul.f32 %v294, %v244
        %v296 = vmul.f32 %v294, %v245
        %v297 = vmul.f32 %v294, %v246
        %v298 = vmul.f32 %v294, %v247
        %v299 = vmul.f32 %v294, %v248
        %v300 = vmul.f32 %v294, %v249
        %v301 = vmul.f32 %v294, %v250
        %v302 = vmul.f32 %v294, %v251
        %v303 = vmul.f32 %v294, %v252
        %v304 = vmul.f32 %v294, %v253
        %v305 = vmul.f32 %v294, %v254
        %v306 = vmul.f32 %v294, %v255
        %v307 = vmul.f32 %v294, %v256
        %v308 = vmul.f32 %v294, %v257
        %v309 = vmul.f32 %v294, %v258
        %v310 = vmul.f32 %v294, %v259
        %v311 = vadd.f32 %v277, %v295
        %v312 = vadd.f32 %v278, %v296
        %v313 = vadd.f32 %v279, %v297
        %v314 = vadd.f32 %v280, %v298
        %v315 = vadd.f32 %v281, %v299
        %v316 = vadd.f32 %v282, %v300
        %v317 = vadd.f32 %v283, %v301
        %v318 = vadd.f32 %v284, %v302
        %v319 = vadd.f32 %v285, %v303
        %v320 = vadd.f32 %v286, %v304
        %v321 = vadd.f32 %v287, %v305
        %v322 = vadd.f32 %v288, %v306
        %v323 = vadd.f32 %v289, %v307
        %v324 = vadd.f32 %v290, %v308
        %v325 = vadd.f32 %v291, %v309
        %v326 = vadd.f32 %v292, %v310
        %327 = vst [vmem:[%s231] sm:$0xff] %v311
        %328 = vst [vmem:[%s231 + $0x8] sm:$0xff] %v312
        %329 = vst [vmem:[%s231 + $0x10] sm:$0xff] %v313
        %330 = vst [vmem:[%s231 + $0x18] sm:$0xff] %v314
        %331 = vst [vmem:[%s231 + $0x20] sm:$0xff] %v315
        %332 = vst [vmem:[%s231 + $0x28] sm:$0xff] %v316
        %333 = vst [vmem:[%s231 + $0x30] sm:$0xff] %v317
        %334 = vst [vmem:[%s231 + $0x38] sm:$0xff] %v318
        %335 = vst [vmem:[%s231 + $0x40] sm:$0xff] %v319
        %336 = vst [vmem:[%s231 + $0x48] sm:$0xff] %v320
        %337 = vst [vmem:[%s231 + $0x50] sm:$0xff] %v321
        %338 = vst [vmem:[%s231 + $0x58] sm:$0xff] %v322
        %339 = vst [vmem:[%s231 + $0x60] sm:$0xff] %v323
        %340 = vst [vmem:[%s231 + $0x68] sm:$0xff] %v324
        %341 = vst [vmem:[%s231 + $0x70] sm:$0xff] %v325
        %342 = vst [vmem:[%s231 + $0x78] sm:$0xff] %v326
        %s343 = sand.u32 %s105, 1
        %s344 = scalar_lea.sflag [#allocation5], %s343
        %s345 = sand.u32 %s105, 1
        %s346 = smul.addr %s345, 128
        %s347 = scalar_lea.vmem [#allocation8], %s346
        // Predicated region
        $region41: #{_ema_update_packed.1} parent=31 // pred_check
          %p348 = pneg %p115
        $region42: #{_ema_update_packed.1} parent=31 // pred_check_branch
          %350 = sbr.rel (%p348) target = $region44
        $region43: #{_ema_update_packed.1} parent=31 // pred_region
          %s351 = smul.u32 2, %s24
          %s353 = ssub.s32 2048, 2048
          %354 = vsyncadd %s344, %s353
          %s355 = smul.addr %s351, 8
          %s356 = smul.addr %s355, 128
          %s357 = scalar_lea.hbm %s3, %s356
          %s358 = sshll.u32 %s347, 4
          %s359 = int_to_ptr.vmem [resolvable:$true] %s358
          %364 = dma.vmem_to_hbm [thread:$0]  %s359, 2048, %s357, %s344, 1024, 1024, 64
        $region44: #{_ema_update_packed.1} parent=31 // pred_fallthru
          _
      $region32: #{_ema_update_packed.1} parent=5 // pred_fallthru
        _
      %p365 = scmp.le.s32.totalorder 2, %s19
      // Predicated region
      $region45: #{_ema_update_packed.1} parent=5 // pred_check
        %p366 = pneg %p365
      $region46: #{_ema_update_packed.1} parent=5 // pred_check_branch
        %368 = sbr.rel (%p366) target = $region48
      $region47: #{_ema_update_packed.1} parent=5 // pred_region
        %s369 = ssub.s32 %s19, 2
        // Predicated region
        $region49: #{_ema_update_packed.1} parent=47 // pred_check
          %p370 = pneg %p121
        $region50: #{_ema_update_packed.1} parent=47 // pred_check_branch
          %372 = sbr.rel (%p370) target = $region52
        $region51: #{_ema_update_packed.1} parent=47 // pred_region
          %s373 = sand.u32 %s106, 1
          %s374 = scalar_lea.sflag [#allocation5], %s373
          %s375 = sand.u32 %s106, 1
          %s376 = smul.addr %s375, 128
          %s377 = scalar_lea.vmem [#allocation8], %s376
          %378 = dma.done %s374, 2048
        $region52: #{_ema_update_packed.1} parent=47 // pred_fallthru
          _
      $region48: #{_ema_update_packed.1} parent=5 // pred_fallthru
        _
    $region6: #{_ema_update_packed.1} parent=1 // loop_footer
      %s23 = sadd.s32 1, %s19
    $region7: #{_ema_update_packed.1} parent=1 // loop_footer_branch
      %18 = sbr.rel target = $region3
    $region8: #{_ema_update_packed.1} parent=1 // loop_exit
      _
    %379 = vsyncpa [#allocation4], 1
    %s380 = scalar_lea.sflag [#allocation4], 1
    %381 = vsyncpa %s380, 1
    %382 = vsyncpa [#allocation7], 1
    %s383 = scalar_lea.sflag [#allocation7], 1
    %384 = vsyncpa %s383, 1
    %385 = vsyncpa [#allocation5], 1
    %s386 = scalar_lea.sflag [#allocation5], 1
    %387 = vsyncpa %s386, 1

</llo_original>
